<compile_context>
chip_gen: v6e
topology: v6e:2x2x1
jax: 0.10.0
libtpu: 0.0.40
codegen_flags: <defaults>
</compile_context>

<pallas_src>
from typing import NamedTuple

import jax
import jax.numpy as jnp
from jax.experimental import pallas as pl
from jax.experimental.pallas import tpu as pltpu

LANE = 128          # vreg lane width (last dim)
BF16_SUBLANE = 16   # packed sublane tile for bf16 second-to-last dims


def _round_up(n: int, m: int) -> int:
    return ((n + m - 1) // m) * m


def _tpu_defaults():
    """(mxu_rows, vmem_budget_bytes, vmem_limit_bytes) for the local TPU gen."""
    kind = ""
    try:
        kind = jax.devices()[0].device_kind.lower()
    except Exception:
        pass
    old_gen = any(t in kind for t in ("v2", "v3", "v4", "v5"))
    mxu_rows = 128 if old_gen else 256            # v5e MXU 4x128^2; v6e/v7x 2x256^2
    if "v7" in kind:
        # v7x: 64 MiB VMEM per TensorCore -> stay well clear of it.
        return mxu_rows, 40 << 20, 48 << 20
    # v5e / v6e: 128 MiB physical VMEM (only the default *scoped* limit is small).
    return mxu_rows, 96 << 20, 100 << 20


def _dnn_kernel(x_ref, w1_ref, b1_ref, w2_ref, b2_ref, o_ref, acc_ref):
    k = pl.program_id(1)                          # hidden-dim (reduction) axis

    @pl.when(k == 0)
    def _():
        acc_ref[...] = jnp.zeros_like(acc_ref)

    # Cast activations to the weight dtype inside the kernel (free VALU work).
    x = x_ref[...].astype(w1_ref.dtype)
    # fc1 (this H tile): bf16 MXU matmul with f32 accumulation; bias+ReLU in f32.
    h = jnp.dot(x, w1_ref[...], preferred_element_type=jnp.float32)
    h = jnp.maximum(h + b1_ref[...], 0.0)
    # fc2 partial product over this H tile, accumulated in f32.
    acc_ref[...] += jnp.dot(h.astype(w2_ref.dtype), w2_ref[...],
                            preferred_element_type=jnp.float32)

    @pl.when(k == pl.num_programs(1) - 1)
    def _():
        o_ref[...] = (acc_ref[...] + b2_ref[...]).astype(o_ref.dtype)


class PreparedParams(NamedTuple):
    w1: jax.Array   # [D_in, H_pad]        compute dtype (bf16)
    b1: jax.Array   # [1, H_pad]           f32
    w2: jax.Array   # [H_pad, D_out_pad]   compute dtype (bf16)
    b2: jax.Array   # [1, D_out_pad]       f32
    d_in: int
    hidden: int
    d_out: int


def prepare_params(w1, b1, w2, b2, compute_dtype=jnp.bfloat16) -> PreparedParams:
    """Cast + lane-pad the weights ONCE. Cache the result and reuse per call."""
    d_in, hidden = w1.shape
    d_out = w2.shape[1]
    h_p = _round_up(hidden, LANE)
    d_out_p = _round_up(d_out, LANE)
    w1_c = jnp.pad(w1.astype(compute_dtype), ((0, 0), (0, h_p - hidden)))
    w2_c = jnp.pad(w2.astype(compute_dtype),
                   ((0, h_p - hidden), (0, d_out_p - d_out)))
    b1_c = jnp.pad(b1.astype(jnp.float32), (0, h_p - hidden)).reshape(1, h_p)
    b2_c = jnp.pad(b2.astype(jnp.float32), (0, d_out_p - d_out)).reshape(1, d_out_p)
    return PreparedParams(w1_c, b1_c, w2_c, b2_c, d_in, hidden, d_out)


def simple_dnn_apply(x, params: PreparedParams, *, block_b=None):
    """Fused fc1 -> ReLU -> fc2 with prepared (cast+padded) weights."""
    B, d_in = x.shape
    assert d_in == params.d_in, "input feature dim mismatch"
    h_p = params.w1.shape[1]
    d_out_p = params.w2.shape[1]
    hidden, d_out = params.hidden, params.d_out
    out_dtype = x.dtype

    cs = jnp.dtype(params.w1.dtype).itemsize
    xs = jnp.dtype(x.dtype).itemsize
    os = jnp.dtype(out_dtype).itemsize

    mxu_rows, vmem_budget, vmem_limit = _tpu_defaults()

    # ---- batch tile: MXU-row aligned; >= 2 grid steps whenever B allows -----
    if block_b is None:
        if B <= 2 * mxu_rows:
            block_b = _round_up(B, BF16_SUBLANE)        # tiny batch: one tile
        else:
            block_b = min(1024, _round_up((B + 1) // 2, mxu_rows))
    block_b = max(BF16_SUBLANE, _round_up(block_b, BF16_SUBLANE))

    # ---- honest VMEM working-set accounting ----------------------------------
    def working_set(bb, th, nh):
        wbuf = 1 if nh == 1 else 2                      # invariant -> 1 buffer
        weights = wbuf * ((d_in * th + th * d_out_p) * cs + (th + d_out_p) * 4)
        x_tile = 2 * bb * d_in * xs                     # double-buffered x tile
        x_cast = bb * d_in * cs                         # in-kernel bf16 copy of x
        o_tile = 2 * bb * d_out_p * os                  # double-buffered out tile
        acc = bb * d_out_p * 4                          # f32 accumulator scratch
        hid = bb * th * (4 + cs)                        # f32 h + bf16 copy for fc2
        return weights + x_tile + x_cast + o_tile + acc + hid + (2 << 20)

    def next_divisor_tile(total, below):
        # Largest multiple of LANE that divides `total` and is < `below`.
        t = below - LANE
        while t >= LANE:
            if total % t == 0:
                return t
            t -= LANE
        return LANE

    tile_h, n_h = h_p, 1
    floor_b = min(block_b, mxu_rows)
    while working_set(block_b, tile_h, n_h) > vmem_budget:
        if block_b > floor_b:
            block_b = max(floor_b, ((block_b // 2) // BF16_SUBLANE) * BF16_SUBLANE)
        elif tile_h > LANE:
            # Stream smaller weight tiles over a reduction grid axis; keep M big.
            tile_h = next_divisor_tile(h_p, tile_h)
            n_h = h_p // tile_h
        elif block_b > BF16_SUBLANE:
            block_b = max(BF16_SUBLANE,
                          ((block_b // 2) // BF16_SUBLANE) * BF16_SUBLANE)
        else:
            # TODO(synk): also tile D_in / D_out for pathologically wide layers.
            break

    # ---- batch padding only when needed (x otherwise passed through as-is) ---
    b_padded = _round_up(B, block_b)
    x_in = jnp.pad(x, ((0, b_padded - B), (0, 0))) if b_padded != B else x

    grid = (b_padded // block_b, n_h)

    invariant = dict(pipeline_mode=pl.Buffered(1))      # no dead double copies
    w_mode = invariant if n_h == 1 else {}              # weights vary over k if tiled

    cost = pl.CostEstimate(
        flops=2 * B * (d_in * hidden + hidden * d_out),
        transcendentals=0,
        bytes_accessed=(B * d_in * xs + d_in * h_p * cs + h_p * d_out_p * cs
                        + (h_p + d_out_p) * 4 + b_padded * d_out_p * os),
    )

    out_padded = pl.pallas_call(
        _dnn_kernel,
        out_shape=jax.ShapeDtypeStruct((b_padded, d_out_p), out_dtype),
        grid_spec=pltpu.PrefetchScalarGridSpec(
            num_scalar_prefetch=0,
            grid=grid,
            in_specs=[
                pl.BlockSpec((block_b, d_in), lambda i, k: (i, 0)),             # x
                pl.BlockSpec((d_in, tile_h), lambda i, k: (0, k), **w_mode),    # w1
                pl.BlockSpec((1, tile_h), lambda i, k: (0, k), **w_mode),       # b1
                pl.BlockSpec((tile_h, d_out_p), lambda i, k: (k, 0), **w_mode), # w2
                pl.BlockSpec((1, d_out_p), lambda i, k: (0, 0), **invariant),   # b2
            ],
            out_specs=pl.BlockSpec((block_b, d_out_p), lambda i, k: (i, 0)),
            scratch_shapes=[pltpu.VMEM((block_b, d_out_p), jnp.float32)],
        ),
        compiler_params=pltpu.CompilerParams(
            dimension_semantics=("parallel", "arbitrary"),
            vmem_limit_bytes=vmem_limit,
        ),
        cost_estimate=cost,
    )(x_in, params.w1, params.b1, params.w2, params.b2)

    # Skip the slice entirely when no padding was actually added.
    if b_padded == B and d_out_p == d_out:
        return out_padded
    return out_padded[:B, :d_out]


def simple_dnn(x, w1, b1, w2, b2, *, block_b=None, compute_dtype=jnp.bfloat16):
    """Convenience wrapper. For repeated calls, cache prepare_params() instead."""
    return simple_dnn_apply(x, prepare_params(w1, b1, w2, b2, compute_dtype),
                            block_b=block_b)


def init_params(key, input_dim, hidden_dim, output_dim, dtype=jnp.float32):
    """nn.Linear-style init (uniform +/- 1/sqrt(fan_in)), weights stored [in, out]."""
    k1, k2, k3, k4 = jax.random.split(key, 4)
    lim1 = 1.0 / (input_dim ** 0.5)
    lim2 = 1.0 / (hidden_dim ** 0.5)
    w1 = jax.random.uniform(k1, (input_dim, hidden_dim), dtype, -lim1, lim1)
    b1 = jax.random.uniform(k2, (hidden_dim,), dtype, -lim1, lim1)
    w2 = jax.random.uniform(k3, (hidden_dim, output_dim), dtype, -lim2, lim2)
    b2 = jax.random.uniform(k4, (output_dim,), dtype, -lim2, lim2)
    return w1, b1, w2, b2


if __name__ == "__main__":
    # Small shapes consistent with the module.
    input_dim, hidden_dim, output_dim = 32, 64, 16
    batch = 8

    key = jax.random.PRNGKey(0)
    kx, kp = jax.random.split(key)
    x = jax.random.normal(kx, (batch, input_dim), jnp.float32)
    w1, b1, w2, b2 = init_params(kp, input_dim, hidden_dim, output_dim)

    params = prepare_params(w1, b1, w2, b2)     # one-time weight repack (cacheable)
    out = simple_dnn_apply(x, params)
    out = jax.block_until_ready(out)
    assert out.shape == (batch, output_dim)

    # Reference 1: identical numerics (bf16 MXU inputs, f32 accumulation).
    hr = jnp.maximum(
        jnp.dot(x.astype(jnp.bfloat16), w1.astype(jnp.bfloat16),
                preferred_element_type=jnp.float32) + b1, 0.0)
    ref_bf16 = jnp.dot(hr.astype(jnp.bfloat16), w2.astype(jnp.bfloat16),
                       preferred_element_type=jnp.float32) + b2
    assert jnp.allclose(out, ref_bf16, atol=1e-4, rtol=1e-4)

    # Reference 2: full-f32 PyTorch-equivalent forward (bf16 MXU tolerance).
    ref_f32 = jnp.maximum(x @ w1 + b1, 0.0) @ w2 + b2
    assert jnp.allclose(out, ref_f32, atol=5e-2, rtol=5e-2)

    print("KERNEL_OK")
</pallas_src>

<mosaic_0001>
module attributes {stable_mosaic.version = 11 : i64} {
  func.func @_dnn_kernel(%arg0: i32, %arg1: i32, %arg2: memref<16x32xf32, #tpu.memory_space<vmem>>, %arg3: memref<32x128xbf16, #tpu.memory_space<vmem>>, %arg4: memref<1x128xf32, #tpu.memory_space<vmem>>, %arg5: memref<128x128xbf16, #tpu.memory_space<vmem>>, %arg6: memref<1x128xf32, #tpu.memory_space<vmem>>, %arg7: memref<16x128xf32, #tpu.memory_space<vmem>>, %arg8: memref<16x128xf32, #tpu.memory_space<vmem>>) attributes {dimension_semantics = [#tpu.dimension_semantics<parallel>, #tpu.dimension_semantics<arbitrary>], iteration_bounds = array<i64: 1, 1>, scalar_prefetch = 0 : i64, scratch_operands = 1 : i64, tpu.core_type = #tpu.core_type<tc>, window_params = [{transform_indices = @transform_0, window_bounds = array<i64: 16, 32>}, {pipeline_mode = #tpu.pipeline_mode<synchronous>, transform_indices = @transform_1, window_bounds = array<i64: 32, 128>}, {pipeline_mode = #tpu.pipeline_mode<synchronous>, transform_indices = @transform_2, window_bounds = array<i64: 1, 128>}, {pipeline_mode = #tpu.pipeline_mode<synchronous>, transform_indices = @transform_3, window_bounds = array<i64: 128, 128>}, {pipeline_mode = #tpu.pipeline_mode<synchronous>, transform_indices = @transform_4, window_bounds = array<i64: 1, 128>}, {transform_indices = @transform_5, window_bounds = array<i64: 16, 128>}]} {
    %c0_i32 = arith.constant 0 : i32
    %0 = arith.cmpi eq, %arg1, %c0_i32 : i32
    %1 = arith.extui %0 : i1 to i32
    %c0_i32_0 = arith.constant 0 : i32
    %2 = arith.cmpi ne, %1, %c0_i32_0 : i32
    scf.if %2 {
      %cst_16 = arith.constant 0.000000e+00 : f32
      %21 = vector.broadcast %cst_16 : f32 to vector<16x128xf32>
      %c0_17 = arith.constant 0 : index
      %c0_18 = arith.constant 0 : index
      %22 = vector.load %arg8[%c0_17, %c0_18] : memref<16x128xf32, #tpu.memory_space<vmem>>, vector<16x128xf32>
      tpu.vector_store %arg8[%c0_17, %c0_18], %21 {strides = array<i32>} : memref<16x128xf32, #tpu.memory_space<vmem>>, vector<16x128xf32>,
    } else {
    }
    %c0 = arith.constant 0 : index
    %c0_1 = arith.constant 0 : index
    %3 = vector.load %arg2[%c0, %c0_1] : memref<16x32xf32, #tpu.memory_space<vmem>>, vector<16x32xf32>
    %4 = arith.truncf %3 : vector<16x32xf32> to vector<16x32xbf16>
    %c0_2 = arith.constant 0 : index
    %c0_3 = arith.constant 0 : index
    %5 = vector.load %arg3[%c0_2, %c0_3] : memref<32x128xbf16, #tpu.memory_space<vmem>>, vector<32x128xbf16>
    %cst = arith.constant dense<0.000000e+00> : vector<16x128xf32>
    %6 = tpu.matmul %4, %5, %cst {dimension_numbers = #tpu.dot_dimension_numbers<[1], [0], [0], [1], [0, 0, 1, 1], [], []>} : vector<16x32xbf16>, vector<32x128xbf16>, vector<16x128xf32> -> vector<16x128xf32>
    %c0_4 = arith.constant 0 : index
    %c0_5 = arith.constant 0 : index
    %7 = vector.load %arg4[%c0_4, %c0_5] : memref<1x128xf32, #tpu.memory_space<vmem>>, vector<1x128xf32>
    %8 = vector.broadcast %7 : vector<1x128xf32> to vector<16x128xf32>
    %9 = arith.addf %6, %8 : vector<16x128xf32>
    %cst_6 = arith.constant 0.000000e+00 : f32
    %10 = vector.broadcast %cst_6 : f32 to vector<16x128xf32>
    %11 = arith.maximumf %9, %10 : vector<16x128xf32>
    %c0_7 = arith.constant 0 : index
    %c0_8 = arith.constant 0 : index
    %12 = vector.load %arg8[%c0_7, %c0_8] : memref<16x128xf32, #tpu.memory_space<vmem>>, vector<16x128xf32>
    %13 = arith.truncf %11 : vector<16x128xf32> to vector<16x128xbf16>
    %c0_9 = arith.constant 0 : index
    %c0_10 = arith.constant 0 : index
    %14 = vector.load %arg5[%c0_9, %c0_10] : memref<128x128xbf16, #tpu.memory_space<vmem>>, vector<128x128xbf16>
    %cst_11 = arith.constant dense<0.000000e+00> : vector<16x128xf32>
    %15 = tpu.matmul %13, %14, %cst_11 {dimension_numbers = #tpu.dot_dimension_numbers<[1], [0], [0], [1], [0, 0, 1, 1], [], []>} : vector<16x128xbf16>, vector<128x128xbf16>, vector<16x128xf32> -> vector<16x128xf32>
    %16 = arith.addf %12, %15 : vector<16x128xf32>
    %c0_12 = arith.constant 0 : index
    %c0_13 = arith.constant 0 : index
    %17 = vector.load %arg8[%c0_12, %c0_13] : memref<16x128xf32, #tpu.memory_space<vmem>>, vector<16x128xf32>
    tpu.vector_store %arg8[%c0_12, %c0_13], %16 {strides = array<i32>} : memref<16x128xf32, #tpu.memory_space<vmem>>, vector<16x128xf32>,
    %c0_i32_14 = arith.constant 0 : i32
    %18 = arith.cmpi eq, %arg1, %c0_i32_14 : i32
    %19 = arith.extui %18 : i1 to i32
    %c0_i32_15 = arith.constant 0 : i32
    %20 = arith.cmpi ne, %19, %c0_i32_15 : i32
    scf.if %20 {
      %c0_16 = arith.constant 0 : index
      %c0_17 = arith.constant 0 : index
      %21 = vector.load %arg8[%c0_16, %c0_17] : memref<16x128xf32, #tpu.memory_space<vmem>>, vector<16x128xf32>
      %c0_18 = arith.constant 0 : index
      %c0_19 = arith.constant 0 : index
      %22 = vector.load %arg6[%c0_18, %c0_19] : memref<1x128xf32, #tpu.memory_space<vmem>>, vector<1x128xf32>
      %23 = vector.broadcast %22 : vector<1x128xf32> to vector<16x128xf32>
      %24 = arith.addf %21, %23 : vector<16x128xf32>
      %c0_20 = arith.constant 0 : index
      %c0_21 = arith.constant 0 : index
      %25 = vector.load %arg7[%c0_20, %c0_21] : memref<16x128xf32, #tpu.memory_space<vmem>>, vector<16x128xf32>
      tpu.vector_store %arg7[%c0_20, %c0_21], %24 {strides = array<i32>} : memref<16x128xf32, #tpu.memory_space<vmem>>, vector<16x128xf32>,
    } else {
    }
    return
  }
  func.func @transform_0(%arg0: i32, %arg1: i32) -> (i32, i32) {
    %c0_i32 = arith.constant 0 : i32
    %c0_i32_0 = arith.constant 0 : i32
    return %arg0, %c0_i32 : i32, i32
  }
  func.func @transform_1(%arg0: i32, %arg1: i32) -> (i32, i32) {
    %c0_i32 = arith.constant 0 : i32
    %c0_i32_0 = arith.constant 0 : i32
    return %c0_i32, %arg1 : i32, i32
  }
  func.func @transform_2(%arg0: i32, %arg1: i32) -> (i32, i32) {
    %c0_i32 = arith.constant 0 : i32
    %c0_i32_0 = arith.constant 0 : i32
    return %c0_i32, %arg1 : i32, i32
  }
  func.func @transform_3(%arg0: i32, %arg1: i32) -> (i32, i32) {
    %c0_i32 = arith.constant 0 : i32
    %c0_i32_0 = arith.constant 0 : i32
    return %arg1, %c0_i32 : i32, i32
  }
  func.func @transform_4(%arg0: i32, %arg1: i32) -> (i32, i32) {
    %c0_i32 = arith.constant 0 : i32
    %c0_i32_0 = arith.constant 0 : i32
    %c0_i32_1 = arith.constant 0 : i32
    return %c0_i32, %c0_i32_0 : i32, i32
  }
  func.func @transform_5(%arg0: i32, %arg1: i32) -> (i32, i32) {
    %c0_i32 = arith.constant 0 : i32
    %c0_i32_0 = arith.constant 0 : i32
    return %arg0, %c0_i32 : i32, i32
  }
}

</mosaic_0001>

<llo_original>
// kernel: tpu_custom_call.1
$region0: #{tpu_custom_call.1}
  #allocation0 [shape = 'u32[]', space=smem, size = 0x4, offset = 0x4, fixed_abs, tag = 'smem constant byte address 0x4 - core index']
  #allocation1 [shape = 'u32[144,128]{1,0:T(1,128)}', space=vmem, size = 0x12000, scoped, tag = 'internal scratch']
  #allocation2 [shape = 'f32[16,128]{1,0:T(8,128)}', space=vmem, size = 0x2000, scoped, tag = 'scratch operand']
  %s0 = inlined_call_operand.hbm [shape: f32[16,32], index: 0, kind: input, shape index: {}]
  %s1 = inlined_call_operand.hbm [shape: bf16[32,128], index: 1, kind: input, shape index: {}]
  %s2 = inlined_call_operand.vmem [shape: f32[1,128], index: 2, kind: input, shape index: {}]
  %s3 = inlined_call_operand.hbm [shape: bf16[128,128], index: 3, kind: input, shape index: {}]
  %s4 = inlined_call_operand.vmem [shape: f32[1,128], index: 4, kind: input, shape index: {}]
  %s5 = inlined_call_operand.hbm [shape: f32[16,128], index: 5, kind: output, shape index: {}]
  %s6 = sld [smem:[#allocation0]]
  $region50: #{tpu_custom_call.1} parent=0
    _
  %s8 = ssub.s32 1, %s6
  %s9 = scalar_select 0, %s8, %s6
  $region1: #{tpu_custom_call.1} parent=0
    #allocation3 [shape = 'u8[8192]{0}', space=vmem, size = 0x2000, scoped, tag = 'input window, operand 0, single buffered']
    #allocation4 [shape = 's32[1]{0}', space=sflag, size = 0x4, scoped, tag = 'scoped memory for tpu_custom_call.1']
    #allocation5 [shape = 's32[1]{0}', space=sflag, size = 0x4, scoped, tag = 'scoped memory for tpu_custom_call.1']
    #allocation6 [shape = 'u8[8192]{0}', space=vmem, size = 0x2000, scoped, tag = 'input window, operand 1, single buffered']
    #allocation7 [shape = 's32[1]{0}', space=sflag, size = 0x4, scoped, tag = 'scoped memory for tpu_custom_call.1']
    #allocation8 [shape = 'u8[32768]{0}', space=vmem, size = 0x8000, scoped, tag = 'input window, operand 3, single buffered']
    #allocation9 [shape = 'u8[8192]{0}', space=vmem, size = 0x2000, scoped, tag = 'output window, operand 0, single buffered']
    %10 = vsyncpa [#allocation4], 0
    %11 = vsyncpa [#allocation7], 0
    %12 = vsyncpa [#allocation5], 0
    // Predicated region
    $region2: #{tpu_custom_call.1} parent=1 // pred_check
      _
    $region3: #{tpu_custom_call.1} parent=1 // pred_check_branch
      %14 = sbr.rel (0) target = $region5
    $region4: #{tpu_custom_call.1} parent=1 // pred_region
      %s16 = ssub.s32 256, 256
      %17 = vsyncadd [#allocation4], %s16
      %s18 = sshll.u32 [#allocation3], 4
      %s19 = int_to_ptr.vmem [resolvable:$true] %s18
      %24 = dma.hbm_to_vmem [thread:$0]  %s0, 256, %s19, [#allocation4], 128, 128, 8
    $region5: #{tpu_custom_call.1} parent=1 // pred_fallthru
      _
    // Predicated region
    $region6: #{tpu_custom_call.1} parent=1 // pred_check
      _
    $region7: #{tpu_custom_call.1} parent=1 // pred_check_branch
      %26 = sbr.rel (0) target = $region9
    $region8: #{tpu_custom_call.1} parent=1 // pred_region
      %s28 = ssub.s32 256, 256
      %29 = vsyncadd [#allocation7], %s28
      %s30 = sshll.u32 [#allocation6], 4
      %s31 = int_to_ptr.vmem [resolvable:$true] %s30
      %36 = dma.hbm_to_vmem [thread:$0]  %s1, 256, %s31, [#allocation7], 64, 64, 4
    $region9: #{tpu_custom_call.1} parent=1 // pred_fallthru
      _
    // Predicated region
    $region10: #{tpu_custom_call.1} parent=1 // pred_check
      _
    $region11: #{tpu_custom_call.1} parent=1 // pred_check_branch
      %38 = sbr.rel (0) target = $region13
    $region12: #{tpu_custom_call.1} parent=1 // pred_region
      _
    $region13: #{tpu_custom_call.1} parent=1 // pred_fallthru
      _
    // Predicated region
    $region14: #{tpu_custom_call.1} parent=1 // pred_check
      _
    $region15: #{tpu_custom_call.1} parent=1 // pred_check_branch
      %40 = sbr.rel (0) target = $region17
    $region16: #{tpu_custom_call.1} parent=1 // pred_region
      %s42 = ssub.s32 1024, 1024
      %43 = vsyncadd [#allocation7], %s42
      %s44 = sshll.u32 [#allocation8], 4
      %s45 = int_to_ptr.vmem [resolvable:$true] %s44
      %50 = dma.hbm_to_vmem [thread:$0]  %s3, 1024, %s45, [#allocation7], 64, 64, 4
    $region17: #{tpu_custom_call.1} parent=1 // pred_fallthru
      _
    // Predicated region
    $region18: #{tpu_custom_call.1} parent=1 // pred_check
      _
    $region19: #{tpu_custom_call.1} parent=1 // pred_check_branch
      %52 = sbr.rel (0) target = $region21
    $region20: #{tpu_custom_call.1} parent=1 // pred_region
      _
    $region21: #{tpu_custom_call.1} parent=1 // pred_fallthru
      _
    // Predicated region
    $region22: #{tpu_custom_call.1} parent=1 // pred_check
      _
    $region23: #{tpu_custom_call.1} parent=1 // pred_check_branch
      %54 = sbr.rel (0) target = $region25
    $region24: #{tpu_custom_call.1} parent=1 // pred_region
      %55 = dma.done [#allocation4], 256
    $region25: #{tpu_custom_call.1} parent=1 // pred_fallthru
      _
    // Predicated region
    $region26: #{tpu_custom_call.1} parent=1 // pred_check
      _
    $region27: #{tpu_custom_call.1} parent=1 // pred_check_branch
      %57 = sbr.rel (0) target = $region29
    $region28: #{tpu_custom_call.1} parent=1 // pred_region
      %58 = dma.done [#allocation7], 256
    $region29: #{tpu_custom_call.1} parent=1 // pred_fallthru
      _
    // Predicated region
    $region30: #{tpu_custom_call.1} parent=1 // pred_check
      _
    $region31: #{tpu_custom_call.1} parent=1 // pred_check_branch
      %60 = sbr.rel (0) target = $region33
    $region32: #{tpu_custom_call.1} parent=1 // pred_region
      %61 = dma.done [#allocation7], 1024
    $region33: #{tpu_custom_call.1} parent=1 // pred_fallthru
      _
    %p63 = scmp.eq.s32.totalorder 0, 0
    // Predicated region
    $region34: #{tpu_custom_call.1} parent=1 // pred_check
      %p64 = pneg %p63
    $region35: #{tpu_custom_call.1} parent=1 // pred_check_branch
      %66 = sbr.rel (%p64) target = $region37
    $region36: #{tpu_custom_call.1} parent=1 // pred_region
      %67 = vst [vmem:[#allocation2] sm:$0xff] 0.0
      %68 = vst [vmem:[#allocation2 + $0x8] sm:$0xff] 0.0
    $region37: #{tpu_custom_call.1} parent=1 // pred_fallthru
      _
    %v69 = vld [vmem:[#allocation3] sm:$0xff]
    %v70 = vld [vmem:[#allocation3 + $0x8] sm:$0xff]
    %v71 = vpack.c.bf16 %v70, %v69
    %v72 = vld [vmem:[#allocation6] sm:$0xf]
    %v73 = vld [vmem:[#allocation6 + $0x4] sm:$0xf]
    %v74 = vld [vmem:[#allocation6 + $0x8] sm:$0xf]
    %v75 = vld [vmem:[#allocation6 + $0xc] sm:$0xf]
    %v76 = vld [vmem:[%s2] sm:$0x1]
    %v78 = vlaneseq
    %v79 = vshrl.u32 %v78, 7
    %v80 = vsub.s32 0, %v79
    %v81 = vrot.slane %v76, %v80
    %v87 = vunpack.c.l.b16 %v72
    %v88 = vunpack.c.l.b16 %v73
    %v89 = vunpack.c.l.b16 %v74
    %v90 = vunpack.c.l.b16 %v75
    %v91 = vpack.c.b16 %v88, %v87
    %v92 = vpack.c.b16 %v90, %v89
    %vm95 = vcmask 261120
    %v97 = vsel %vm95, %v71, 0
    %99 = vmatprep.subr.bf16.mxu0 0
    %100 = vmatpush1.bf16.msra.mxu0 0
    %101 = vmatprep.subr.bf16.mxu0 0
    %102 = vmatpush1.bf16.msra.mxu0 0
    %103 = vmatprep.subr.bf16.mxu0 0
    %104 = vmatpush1.bf16.msra.mxu0 0
    %105 = vmatprep.subr.bf16.mxu0 0
    %106 = vmatpush1.bf16.msra.mxu0 0
    %107 = vmatprep.subr.bf16.mxu0 0
    %108 = vmatpush1.bf16.msra.mxu0 0
    %109 = vmatprep.subr.bf16.mxu0 0
    %110 = vmatpush1.bf16.msra.mxu0 0
    %111 = vmatprep.subr.bf16.mxu0 0
    %112 = vmatpush1.bf16.msra.mxu0 %v92
    %113 = vmatprep.subr.bf16.mxu0 0
    %114 = vmatpush1.bf16.msra.mxu0 %v91
    %115 = vmatprep.subr.bf16.mxu0 0
    %116 = vmatpush2.bf16.msra.mxu0 0
    %117 = vmatprep.subr.bf16.mxu0 0
    %118 = vmatpush2.bf16.msra.mxu0 0
    %119 = vmatprep.subr.bf16.mxu0 0
    %120 = vmatpush2.bf16.msra.mxu0 0
    %121 = vmatprep.subr.bf16.mxu0 0
    %122 = vmatpush2.bf16.msra.mxu0 0
    %123 = vmatprep.subr.bf16.mxu0 0
    %124 = vmatpush2.bf16.msra.mxu0 0
    %125 = vmatprep.subr.bf16.mxu0 0
    %126 = vmatpush2.bf16.msra.mxu0 0
    %127 = vmatprep.subr.bf16.mxu0 0
    %128 = vmatpush2.bf16.msra.mxu0 0
    %129 = vmatprep.subr.bf16.mxu0 0
    %130 = vmatpush2.bf16.msra.mxu0 0
    %131 = vmatprep.mubr.bf16.mxu0 0
    %132 = vmatmul.mubr.bf16.gmra.mxu0 %v97
    %v133 = vpop.f32.mrf.mxu0
    %v134 = vadd.f32 %v81, %v133
    %v135 = vpop.f32.mrf.mxu0
    %v136 = vpop.f32.mrf.mxu0
    %v137 = vadd.f32 %v81, %v136
    %v138 = vpop.f32.mrf.mxu0
    %139 = vdwg.mxu0
    %v140 = vmax.f32 %v134, 0.0
    %v141 = vmax.f32 %v137, 0.0
    %v142 = vld [vmem:[#allocation2] sm:$0xff]
    %v143 = vld [vmem:[#allocation2 + $0x8] sm:$0xff]
    %v144 = vpack.c.bf16 %v141, %v140
    %v145 = vld [vmem:[#allocation8] sm:$0xf]
    %v146 = vld [vmem:[#allocation8 + $0x4] sm:$0xf]
    %v147 = vld [vmem:[#allocation8 + $0x8] sm:$0xf]
    %v148 = vld [vmem:[#allocation8 + $0xc] sm:$0xf]
    %v149 = vld [vmem:[#allocation8 + $0x10] sm:$0xf]
    %v150 = vld [vmem:[#allocation8 + $0x14] sm:$0xf]
    %v151 = vld [vmem:[#allocation8 + $0x18] sm:$0xf]
    %v152 = vld [vmem:[#allocation8 + $0x1c] sm:$0xf]
    %v153 = vld [vmem:[#allocation8 + $0x20] sm:$0xf]
    %v154 = vld [vmem:[#allocation8 + $0x24] sm:$0xf]
    %v155 = vld [vmem:[#allocation8 + $0x28] sm:$0xf]
    %v156 = vld [vmem:[#allocation8 + $0x2c] sm:$0xf]
    %v157 = vld [vmem:[#allocation8 + $0x30] sm:$0xf]
    %v158 = vld [vmem:[#allocation8 + $0x34] sm:$0xf]
    %v159 = vld [vmem:[#allocation8 + $0x38] sm:$0xf]
    %v160 = vld [vmem:[#allocation8 + $0x3c] sm:$0xf]
    %v177 = vunpack.c.l.b16 %v145
    %v178 = vunpack.c.l.b16 %v146
    %v179 = vunpack.c.l.b16 %v147
    %v180 = vunpack.c.l.b16 %v148
    %v181 = vunpack.c.l.b16 %v149
    %v182 = vunpack.c.l.b16 %v150
    %v183 = vunpack.c.l.b16 %v151
    %v184 = vunpack.c.l.b16 %v152
    %v185 = vunpack.c.l.b16 %v153
    %v186 = vunpack.c.l.b16 %v154
    %v187 = vunpack.c.l.b16 %v155
    %v188 = vunpack.c.l.b16 %v156
    %v189 = vunpack.c.l.b16 %v157
    %v190 = vunpack.c.l.b16 %v158
    %v191 = vunpack.c.l.b16 %v159
    %v192 = vunpack.c.l.b16 %v160
    %v193 = vpack.c.b16 %v178, %v177
    %v194 = vpack.c.b16 %v180, %v179
    %v195 = vpack.c.b16 %v182, %v181
    %v196 = vpack.c.b16 %v184, %v183
    %v197 = vpack.c.b16 %v186, %v185
    %v198 = vpack.c.b16 %v188, %v187
    %v199 = vpack.c.b16 %v190, %v189
    %v200 = vpack.c.b16 %v192, %v191
    %209 = vmatprep.subr.bf16.mxu0 0
    %210 = vmatpush1.bf16.msra.mxu0 %v200
    %211 = vmatprep.subr.bf16.mxu0 0
    %212 = vmatpush1.bf16.msra.mxu0 %v199
    %213 = vmatprep.subr.bf16.mxu0 0
    %214 = vmatpush1.bf16.msra.mxu0 %v198
    %215 = vmatprep.subr.bf16.mxu0 0
    %216 = vmatpush1.bf16.msra.mxu0 %v197
    %217 = vmatprep.subr.bf16.mxu0 0
    %218 = vmatpush1.bf16.msra.mxu0 %v196
    %219 = vmatprep.subr.bf16.mxu0 0
    %220 = vmatpush1.bf16.msra.mxu0 %v195
    %221 = vmatprep.subr.bf16.mxu0 0
    %222 = vmatpush1.bf16.msra.mxu0 %v194
    %223 = vmatprep.subr.bf16.mxu0 0
    %224 = vmatpush1.bf16.msra.mxu0 %v193
    %225 = vmatprep.subr.bf16.mxu0 0
    %226 = vmatpush2.bf16.msra.mxu0 0
    %227 = vmatprep.subr.bf16.mxu0 0
    %228 = vmatpush2.bf16.msra.mxu0 0
    %229 = vmatprep.subr.bf16.mxu0 0
    %230 = vmatpush2.bf16.msra.mxu0 0
    %231 = vmatprep.subr.bf16.mxu0 0
    %232 = vmatpush2.bf16.msra.mxu0 0
    %233 = vmatprep.subr.bf16.mxu0 0
    %234 = vmatpush2.bf16.msra.mxu0 0
    %235 = vmatprep.subr.bf16.mxu0 0
    %236 = vmatpush2.bf16.msra.mxu0 0
    %237 = vmatprep.subr.bf16.mxu0 0
    %238 = vmatpush2.bf16.msra.mxu0 0
    %239 = vmatprep.subr.bf16.mxu0 0
    %240 = vmatpush2.bf16.msra.mxu0 0
    %241 = vmatprep.mubr.bf16.mxu0 0
    %242 = vmatmul.mubr.bf16.gmra.mxu0 %v144
    %v243 = vpop.f32.mrf.mxu0
    %v244 = vadd.f32 0.0, %v243
    %v245 = vpop.f32.mrf.mxu0
    %v246 = vpop.f32.mrf.mxu0
    %v247 = vadd.f32 0.0, %v246
    %v248 = vpop.f32.mrf.mxu0
    %249 = vdwg.mxu0
    %v250 = vadd.f32 %v142, %v244
    %v251 = vadd.f32 %v143, %v247
    %252 = vst [vmem:[#allocation2] sm:$0xff] %v250
    %253 = vst [vmem:[#allocation2 + $0x8] sm:$0xff] %v251
    // Predicated region
    $region38: #{tpu_custom_call.1} parent=1 // pred_check
      %p254 = pneg %p63
    $region39: #{tpu_custom_call.1} parent=1 // pred_check_branch
      %256 = sbr.rel (%p254) target = $region41
    $region40: #{tpu_custom_call.1} parent=1 // pred_region
      %v257 = vld [vmem:[#allocation2] sm:$0xff]
      %v258 = vld [vmem:[#allocation2 + $0x8] sm:$0xff]
      %v259 = vld [vmem:[%s4] sm:$0x1]
      %v261 = vlaneseq
      %v262 = vshrl.u32 %v261, 7
      %v263 = vsub.s32 0, %v262
      %v264 = vrot.slane %v259, %v263
      %v266 = vadd.f32 %v257, %v264
      %v267 = vadd.f32 %v258, %v264
      %268 = vst [vmem:[#allocation9] sm:$0xff] %v266
      %269 = vst [vmem:[#allocation9 + $0x8] sm:$0xff] %v267
    $region41: #{tpu_custom_call.1} parent=1 // pred_fallthru
      _
    // Predicated region
    $region42: #{tpu_custom_call.1} parent=1 // pred_check
      _
    $region43: #{tpu_custom_call.1} parent=1 // pred_check_branch
      %271 = sbr.rel (0) target = $region45
    $region44: #{tpu_custom_call.1} parent=1 // pred_region
      %s273 = ssub.s32 256, 256
      %274 = vsyncadd [#allocation5], %s273
      %s275 = sshll.u32 [#allocation9], 4
      %s276 = int_to_ptr.vmem [resolvable:$true] %s275
      %281 = dma.vmem_to_hbm [thread:$0]  %s276, 256, %s5, [#allocation5], 128, 128, 8
    $region45: #{tpu_custom_call.1} parent=1 // pred_fallthru
      _
    // Predicated region
    $region46: #{tpu_custom_call.1} parent=1 // pred_check
      _
    $region47: #{tpu_custom_call.1} parent=1 // pred_check_branch
      %283 = sbr.rel (0) target = $region49
    $region48: #{tpu_custom_call.1} parent=1 // pred_region
      %284 = dma.done [#allocation5], 256
    $region49: #{tpu_custom_call.1} parent=1 // pred_fallthru
      _
    %285 = vsyncpa [#allocation4], 1
    %286 = vsyncpa [#allocation7], 1
    %287 = vsyncpa [#allocation5], 1

</llo_original>
